<compile_context>
chip_gen: v7x
topology: tpu7x:2x2x1
jax: 0.10.0
libtpu: 0.0.40
codegen_flags: <defaults>
</compile_context>

<pallas_src>
import jax
import jax.numpy as jnp
from jax import lax
import numpy as np
from jax.experimental import pallas as pl
from jax.experimental.pallas import tpu as pltpu

# ----------------------------- config ---------------------------------------
N_VOCAB = 50
EMBED = 16
NUM_FILTERS = 8
NUM_CLASSES = 4
BATCH = 2
SEQ = 18  # chosen so the while-loop body runs once and H1 == NUM_FILTERS


def _ru8(x):
    return ((x + 7) // 8) * 8


# ------------------------------ fused kernel ---------------------------------
def _make_kernel(seq, n_vocab, embed, nf, n_classes):
    h0 = seq - 2                    # height after conv_region
    h1 = (h0 + 1 - 3) // 2 + 1      # height after padding2 + maxpool((3,1), stride 2)

    # Column offsets inside the single packed constant slab (8-aligned segments).
    o_tab = 0
    o_sel = o_tab + _ru8(n_vocab)
    o_wr = o_sel + _ru8(h1)
    o_wc = o_wr + _ru8(3 * embed)
    o_wfc = o_wc + _ru8(3 * nf)
    o_br = o_wfc + _ru8(n_classes)
    o_bc = o_br + _ru8(h0)
    o_bfc = o_bc + _ru8(h0)
    w_slab = o_bfc + _ru8(n_classes)
    r_slab = max(embed, h0, nf)

    offs = dict(o_tab=o_tab, o_sel=o_sel, o_wr=o_wr, o_wc=o_wc, o_wfc=o_wfc,
                o_br=o_br, o_bc=o_bc, o_bfc=o_bfc, w=w_slab, r=r_slab)

    def kernel(ids_ref, slab_ref, out_ref, vp16, vp8, mp):
        # ---- zero the persistent padded scratch buffers once; their edge
        #      columns are never written afterwards, so they stay zero ----
        vp16[...] = jnp.zeros_like(vp16)
        vp8[...] = jnp.zeros_like(vp8)
        mp[...] = jnp.zeros_like(mp)

        # ---- static slices of the single packed constant/weight slab ----
        tableT = slab_ref[0:embed, o_tab:o_tab + n_vocab]     # (embed, n_vocab)
        sel = slab_ref[0:h0, o_sel:o_sel + h1]                # (h0, h1) even-col picker
        wrT = slab_ref[0:nf, o_wr:o_wr + 3 * embed]           # (nf, 3*embed)
        wcT = slab_ref[0:nf, o_wc:o_wc + 3 * nf]              # (nf, 3*nf)
        wfcT = slab_ref[0:h1, o_wfc:o_wfc + n_classes]        # (h1==nf, n_classes)
        br_b = slab_ref[0:nf, o_br:o_br + h0]                 # (nf, h0)  bias pre-broadcast
        bc_b = slab_ref[0:nf, o_bc:o_bc + h0]                 # (nf, h0)  bias pre-broadcast
        bfc_b = slab_ref[0:nf, o_bfc:o_bfc + n_classes]       # (nf, n_classes)

        # ---- embedding of batch row 0 as a one-hot matmul (MXU is idle) ----
        ids0 = ids_ref[...]                                   # (1, seq) int32, lane-major
        viota = lax.broadcasted_iota(jnp.int32, (n_vocab, seq), 0)
        onehotT = (viota == ids0).astype(jnp.float32)         # (n_vocab, seq)
        embT = jnp.dot(tableT, onehotT,
                       preferred_element_type=jnp.float32)    # (embed, seq)

        # ---- conv_region: valid 3-tap conv as ONE matmul ----
        slab0 = jnp.concatenate(
            [embT[:, 0:h0], embT[:, 1:h0 + 1], embT[:, 2:h0 + 2]], axis=0)  # (3*embed, h0)
        x = jnp.dot(wrT, slab0, preferred_element_type=jnp.float32) + br_b  # (nf, h0)

        def conv3(v, buf, w):
            """padding1 -> relu -> conv(3,1) as one matmul.

            relu(pad(v)) == pad(relu(v)) since relu(0) == 0; relu(v) is stored
            once into the persistent pre-zeroed scratch (zero edge columns),
            and the 3 tap views are read back and stacked on sublanes.
            """
            buf[:, 1:w + 1] = jnp.maximum(v, 0.0)
            s = jnp.concatenate(
                [buf[:, 0:w], buf[:, 1:w + 1], buf[:, 2:w + 2]], axis=0)     # (3*nf, w)
            return jnp.dot(wcT, s, preferred_element_type=jnp.float32) + bc_b[:, 0:w]

        x = conv3(x, vp16, h0)
        x = conv3(x, vp16, h0)                                               # (nf, h0)

        # ---- `_block` (runs exactly once): padding2 + maxpool((3,1), stride 2) ----
        # window i covers columns 2i, 2i+1, 2i+2 of the bottom-zero-padded map.
        mp[:, 0:h0] = x                      # cols h0, h0+1 stay zero (padding2)
        m = jnp.maximum(jnp.maximum(x, mp[:, 1:h0 + 1]), mp[:, 2:h0 + 2])
        px = jnp.dot(m, sel, preferred_element_type=jnp.float32)            # (nf, h1)

        y = conv3(px, vp8, h1)
        y = conv3(y, vp8, h1)
        y = y + px                                                           # residual

        # ---- fc on the squeezed (nf, h1) map: natural contraction, no transpose ----
        out_ref[...] = jnp.dot(y, wfcT, preferred_element_type=jnp.float32) + bfc_b

    return kernel, h0, h1, offs


# ------------------------------ wrapper --------------------------------------
def dpcnn_forward(ids, params):
    emb_table, w_region, b_region, w_conv, b_conv, w_fc, b_fc = params
    _, seq = ids.shape
    n_vocab, embed = emb_table.shape
    nf = w_conv.shape[0]
    n_classes = w_fc.shape[0]

    kernel, h0, h1, o = _make_kernel(seq, n_vocab, embed, nf, n_classes)
    # while-loop body runs exactly once; fc needs post-block height == nf.
    assert h0 > 2 and h1 == nf, "config must satisfy SEQ-2 > 2 and pooled height == num_filters"

    # --- trace-time constant: even-column selector for the maxpool ---
    sel_np = np.zeros((h0, h1), np.float32)
    sel_np[2 * np.arange(h1), np.arange(h1)] = 1.0

    # --- pack everything into ONE lane-dense f32 slab (pure wrapper glue) ---
    slab = jnp.zeros((o["r"], o["w"]), jnp.float32)
    slab = slab.at[0:embed, o["o_tab"]:o["o_tab"] + n_vocab].set(emb_table.T)
    slab = slab.at[0:h0, o["o_sel"]:o["o_sel"] + h1].set(jnp.asarray(sel_np))
    slab = slab.at[0:nf, o["o_wr"]:o["o_wr"] + 3 * embed].set(
        w_region[:, 0, :, :].reshape(nf, 3 * embed))            # tap-major
    slab = slab.at[0:nf, o["o_wc"]:o["o_wc"] + 3 * nf].set(
        jnp.transpose(w_conv[:, :, :, 0], (0, 2, 1)).reshape(nf, 3 * nf))
    slab = slab.at[0:h1, o["o_wfc"]:o["o_wfc"] + n_classes].set(w_fc.T)
    slab = slab.at[0:nf, o["o_br"]:o["o_br"] + h0].set(
        jnp.broadcast_to(b_region[:, None], (nf, h0)))
    slab = slab.at[0:nf, o["o_bc"]:o["o_bc"] + h0].set(
        jnp.broadcast_to(b_conv[:, None], (nf, h0)))
    slab = slab.at[0:nf, o["o_bfc"]:o["o_bfc"] + n_classes].set(
        jnp.broadcast_to(b_fc[None, :], (nf, n_classes)))

    ids0 = ids[0:1, :].astype(jnp.int32)     # only row 0 contributes to the output

    return pl.pallas_call(
        kernel,
        out_shape=jax.ShapeDtypeStruct((nf, n_classes), jnp.float32),
        in_specs=[
            pl.BlockSpec(memory_space=pltpu.MemorySpace.VMEM),   # ids row 0, (1, seq) int32
            pl.BlockSpec(memory_space=pltpu.MemorySpace.VMEM),   # packed weight/constant slab
        ],
        out_specs=pl.BlockSpec(memory_space=pltpu.MemorySpace.VMEM),
        scratch_shapes=[
            pltpu.VMEM((nf, h0 + 2), jnp.float32),   # padding1 scratch, width h0
            pltpu.VMEM((nf, h1 + 2), jnp.float32),   # padding1 scratch, width h1
            pltpu.VMEM((nf, h0 + 2), jnp.float32),   # padding2/maxpool scratch
        ],
    )(ids0, slab)


# -------------------------- pure-JAX reference --------------------------------
def ref_forward(ids, params):
    emb_table, w_region, b_region, w_conv, b_conv, w_fc, b_fc = params
    dn = ('NCHW', 'OIHW', 'NCHW')
    hi = lax.Precision.HIGHEST

    x = emb_table[ids][:, None, :, :]                            # (B,1,S,E)
    x = lax.conv_general_dilated(x, w_region, (1, 1), 'VALID',
                                 dimension_numbers=dn, precision=hi)
    x = x + b_region[None, :, None, None]                        # (B,F,S-2,1)

    def conv4(t):
        y = lax.conv_general_dilated(t, w_conv, (1, 1), 'VALID',
                                     dimension_numbers=dn, precision=hi)
        return y + b_conv[None, :, None, None]

    pad1_4 = lambda t: jnp.pad(t, ((0, 0), (0, 0), (1, 1), (0, 0)))
    x = conv4(jax.nn.relu(pad1_4(x)))
    x = conv4(jax.nn.relu(pad1_4(x)))

    # while loop body runs exactly once, on x[0]
    x3 = x[0]                                                    # (F, H0, 1)
    xp = jnp.pad(x3, ((0, 0), (0, 1), (0, 0)))                   # padding2
    px = lax.reduce_window(xp, -jnp.inf, lax.max, (1, 3, 1), (1, 2, 1), 'VALID')

    def conv3u(t):
        y = lax.conv_general_dilated(t[None], w_conv, (1, 1), 'VALID',
                                     dimension_numbers=dn, precision=hi)[0]
        return y + b_conv[:, None, None]

    pad1_3 = lambda t: jnp.pad(t, ((0, 0), (1, 1), (0, 0)))
    y = conv3u(jax.nn.relu(pad1_3(px)))
    y = conv3u(jax.nn.relu(pad1_3(y)))
    y = y + px
    y = jnp.squeeze(y)                                           # (F, H1)
    return y @ w_fc.T + b_fc                                     # (F, n_classes)


# ------------------------------- main ----------------------------------------
if __name__ == "__main__":
    key = jax.random.PRNGKey(0)
    ks = jax.random.split(key, 8)
    emb_table = (jax.random.normal(ks[0], (N_VOCAB, EMBED), jnp.float32) * 0.1
                 ).at[0].set(0.0)                                # padding_idx=0
    w_region = jax.random.normal(ks[1], (NUM_FILTERS, 1, 3, EMBED), jnp.float32) * 0.1
    b_region = jax.random.normal(ks[2], (NUM_FILTERS,), jnp.float32) * 0.1
    w_conv = jax.random.normal(ks[3], (NUM_FILTERS, NUM_FILTERS, 3, 1), jnp.float32) * 0.1
    b_conv = jax.random.normal(ks[4], (NUM_FILTERS,), jnp.float32) * 0.1
    w_fc = jax.random.normal(ks[5], (NUM_CLASSES, NUM_FILTERS), jnp.float32) * 0.1
    b_fc = jax.random.normal(ks[6], (NUM_CLASSES,), jnp.float32) * 0.1
    ids = jax.random.randint(ks[7], (BATCH, SEQ), 0, N_VOCAB, dtype=jnp.int32)

    params = (emb_table, w_region, b_region, w_conv, b_conv, w_fc, b_fc)

    out = jax.block_until_ready(dpcnn_forward(ids, params))
    ref = jax.block_until_ready(ref_forward(ids, params))
    assert out.shape == (NUM_FILTERS, NUM_CLASSES)
    np.testing.assert_allclose(np.asarray(out), np.asarray(ref), rtol=2e-3, atol=2e-3)
    print("KERNEL_OK")
</pallas_src>

<mosaic_0001>
module attributes {stable_mosaic.version = 11 : i64} {
  func.func @kernel(%arg0: memref<1x18xi32, #tpu.memory_space<vmem>>, %arg1: memref<16x184xf32, #tpu.memory_space<vmem>>, %arg2: memref<8x4xf32, #tpu.memory_space<vmem>>, %arg3: memref<8x18xf32, #tpu.memory_space<vmem>>, %arg4: memref<8x10xf32, #tpu.memory_space<vmem>>, %arg5: memref<8x18xf32, #tpu.memory_space<vmem>>) attributes {dimension_semantics = [], scalar_prefetch = 0 : i64, scratch_operands = 3 : i64, tpu.core_type = #tpu.core_type<tc>} {
    %cst = arith.constant 0.000000e+00 : f32
    %0 = vector.broadcast %cst : f32 to vector<8x18xf32>
    %c0 = arith.constant 0 : index
    %c0_0 = arith.constant 0 : index
    %1 = vector.load %arg3[%c0, %c0_0] : memref<8x18xf32, #tpu.memory_space<vmem>>, vector<8x18xf32>
    tpu.vector_store %arg3[%c0, %c0_0], %0 {strides = array<i32>} : memref<8x18xf32, #tpu.memory_space<vmem>>, vector<8x18xf32>,
    %cst_1 = arith.constant 0.000000e+00 : f32
    %2 = vector.broadcast %cst_1 : f32 to vector<8x10xf32>
    %c0_2 = arith.constant 0 : index
    %c0_3 = arith.constant 0 : index
    %3 = vector.load %arg4[%c0_2, %c0_3] : memref<8x10xf32, #tpu.memory_space<vmem>>, vector<8x10xf32>
    tpu.vector_store %arg4[%c0_2, %c0_3], %2 {strides = array<i32>} : memref<8x10xf32, #tpu.memory_space<vmem>>, vector<8x10xf32>,
    %cst_4 = arith.constant 0.000000e+00 : f32
    %4 = vector.broadcast %cst_4 : f32 to vector<8x18xf32>
    %c0_5 = arith.constant 0 : index
    %c0_6 = arith.constant 0 : index
    %5 = vector.load %arg5[%c0_5, %c0_6] : memref<8x18xf32, #tpu.memory_space<vmem>>, vector<8x18xf32>
    tpu.vector_store %arg5[%c0_5, %c0_6], %4 {strides = array<i32>} : memref<8x18xf32, #tpu.memory_space<vmem>>, vector<8x18xf32>,
    %c0_7 = arith.constant 0 : index
    %c0_8 = arith.constant 0 : index
    %6 = vector.load %arg1[%c0_7, %c0_8] : memref<16x184xf32, #tpu.memory_space<vmem>>, vector<16x50xf32>
    %c0_9 = arith.constant 0 : index
    %c56 = arith.constant 56 : index
    %7 = vector.load %arg1[%c0_9, %c56] : memref<16x184xf32, #tpu.memory_space<vmem>>, vector<16x8xf32>
    %c0_10 = arith.constant 0 : index
    %c64 = arith.constant 64 : index
    %8 = vector.load %arg1[%c0_10, %c64] : memref<16x184xf32, #tpu.memory_space<vmem>>, vector<8x48xf32>
    %c0_11 = arith.constant 0 : index
    %c112 = arith.constant 112 : index
    %9 = vector.load %arg1[%c0_11, %c112] : memref<16x184xf32, #tpu.memory_space<vmem>>, vector<8x24xf32>
    %c0_12 = arith.constant 0 : index
    %c136 = arith.constant 136 : index
    %10 = vector.load %arg1[%c0_12, %c136] : memref<16x184xf32, #tpu.memory_space<vmem>>, vector<8x4xf32>
    %c0_13 = arith.constant 0 : index
    %c144 = arith.constant 144 : index
    %11 = vector.load %arg1[%c0_13, %c144] : memref<16x184xf32, #tpu.memory_space<vmem>>, vector<8x16xf32>
    %c0_14 = arith.constant 0 : index
    %c160 = arith.constant 160 : index
    %12 = vector.load %arg1[%c0_14, %c160] : memref<16x184xf32, #tpu.memory_space<vmem>>, vector<8x16xf32>
    %c0_15 = arith.constant 0 : index
    %c176 = arith.constant 176 : index
    %13 = vector.load %arg1[%c0_15, %c176] : memref<16x184xf32, #tpu.memory_space<vmem>>, vector<8x4xf32>
    %c0_16 = arith.constant 0 : index
    %c0_17 = arith.constant 0 : index
    %14 = vector.load %arg0[%c0_16, %c0_17] : memref<1x18xi32, #tpu.memory_space<vmem>>, vector<1x18xi32>
    %15 = tpu.iota {dimensions = array<i32: 0>} : vector<50x18xi32>
    %16 = vector.broadcast %14 : vector<1x18xi32> to vector<50x18xi32>
    %17 = arith.cmpi eq, %15, %16 : vector<50x18xi32>
    %18 = arith.extui %17 : vector<50x18xi1> to vector<50x18xi32>
    %19 = arith.sitofp %18 : vector<50x18xi32> to vector<50x18xf32>
    %cst_18 = arith.constant dense<0.000000e+00> : vector<16x18xf32>
    %20 = tpu.matmul %6, %19, %cst_18 {dimension_numbers = #tpu.dot_dimension_numbers<[1], [0], [0], [1], [0, 0, 1, 1], [], []>} : vector<16x50xf32>, vector<50x18xf32>, vector<16x18xf32> -> vector<16x18xf32>
    %21 = vector.extract_strided_slice %20 {offsets = [0, 0], sizes = [16, 16], strides = [1, 1]} : vector<16x18xf32> to vector<16x16xf32>
    %22 = vector.extract_strided_slice %20 {offsets = [0, 1], sizes = [16, 16], strides = [1, 1]} : vector<16x18xf32> to vector<16x16xf32>
    %23 = vector.extract_strided_slice %20 {offsets = [0, 2], sizes = [16, 16], strides = [1, 1]} : vector<16x18xf32> to vector<16x16xf32>
    %24 = tpu.concatenate %21, %22, %23 in 0 : vector<16x16xf32>, vector<16x16xf32>, vector<16x16xf32> -> vector<48x16xf32>
    %cst_19 = arith.constant dense<0.000000e+00> : vector<8x16xf32>
    %25 = tpu.matmul %8, %24, %cst_19 {dimension_numbers = #tpu.dot_dimension_numbers<[1], [0], [0], [1], [0, 0, 1, 1], [], []>} : vector<8x48xf32>, vector<48x16xf32>, vector<8x16xf32> -> vector<8x16xf32>
    %26 = arith.addf %25, %11 : vector<8x16xf32>
    %cst_20 = arith.constant 0.000000e+00 : f32
    %27 = vector.broadcast %cst_20 : f32 to vector<8x16xf32>
    %28 = arith.maximumf %26, %27 : vector<8x16xf32>
    %c0_21 = arith.constant 0 : index
    %c1 = arith.constant 1 : index
    %29 = vector.load %arg3[%c0_21, %c1] : memref<8x18xf32, #tpu.memory_space<vmem>>, vector<8x16xf32>
    tpu.vector_store %arg3[%c0_21, %c1], %28 {strides = array<i32>} : memref<8x18xf32, #tpu.memory_space<vmem>>, vector<8x16xf32>,
    %c0_22 = arith.constant 0 : index
    %c0_23 = arith.constant 0 : index
    %30 = vector.load %arg3[%c0_22, %c0_23] : memref<8x18xf32, #tpu.memory_space<vmem>>, vector<8x16xf32>
    %c0_24 = arith.constant 0 : index
    %c1_25 = arith.constant 1 : index
    %31 = vector.load %arg3[%c0_24, %c1_25] : memref<8x18xf32, #tpu.memory_space<vmem>>, vector<8x16xf32>
    %c0_26 = arith.constant 0 : index
    %c2 = arith.constant 2 : index
    %32 = vector.load %arg3[%c0_26, %c2] : memref<8x18xf32, #tpu.memory_space<vmem>>, vector<8x16xf32>
    %33 = tpu.concatenate %30, %31, %32 in 0 : vector<8x16xf32>, vector<8x16xf32>, vector<8x16xf32> -> vector<24x16xf32>
    %cst_27 = arith.constant dense<0.000000e+00> : vector<8x16xf32>
    %34 = tpu.matmul %9, %33, %cst_27 {dimension_numbers = #tpu.dot_dimension_numbers<[1], [0], [0], [1], [0, 0, 1, 1], [], []>} : vector<8x24xf32>, vector<24x16xf32>, vector<8x16xf32> -> vector<8x16xf32>
    %35 = arith.addf %34, %12 : vector<8x16xf32>
    %cst_28 = arith.constant 0.000000e+00 : f32
    %36 = vector.broadcast %cst_28 : f32 to vector<8x16xf32>
    %37 = arith.maximumf %35, %36 : vector<8x16xf32>
    %c0_29 = arith.constant 0 : index
    %c1_30 = arith.constant 1 : index
    %38 = vector.load %arg3[%c0_29, %c1_30] : memref<8x18xf32, #tpu.memory_space<vmem>>, vector<8x16xf32>
    tpu.vector_store %arg3[%c0_29, %c1_30], %37 {strides = array<i32>} : memref<8x18xf32, #tpu.memory_space<vmem>>, vector<8x16xf32>,
    %c0_31 = arith.constant 0 : index
    %c0_32 = arith.constant 0 : index
    %39 = vector.load %arg3[%c0_31, %c0_32] : memref<8x18xf32, #tpu.memory_space<vmem>>, vector<8x16xf32>
    %c0_33 = arith.constant 0 : index
    %c1_34 = arith.constant 1 : index
    %40 = vector.load %arg3[%c0_33, %c1_34] : memref<8x18xf32, #tpu.memory_space<vmem>>, vector<8x16xf32>
    %c0_35 = arith.constant 0 : index
    %c2_36 = arith.constant 2 : index
    %41 = vector.load %arg3[%c0_35, %c2_36] : memref<8x18xf32, #tpu.memory_space<vmem>>, vector<8x16xf32>
    %42 = tpu.concatenate %39, %40, %41 in 0 : vector<8x16xf32>, vector<8x16xf32>, vector<8x16xf32> -> vector<24x16xf32>
    %cst_37 = arith.constant dense<0.000000e+00> : vector<8x16xf32>
    %43 = tpu.matmul %9, %42, %cst_37 {dimension_numbers = #tpu.dot_dimension_numbers<[1], [0], [0], [1], [0, 0, 1, 1], [], []>} : vector<8x24xf32>, vector<24x16xf32>, vector<8x16xf32> -> vector<8x16xf32>
    %44 = arith.addf %43, %12 : vector<8x16xf32>
    %c0_38 = arith.constant 0 : index
    %c0_39 = arith.constant 0 : index
    %45 = vector.load %arg5[%c0_38, %c0_39] : memref<8x18xf32, #tpu.memory_space<vmem>>, vector<8x16xf32>
    tpu.vector_store %arg5[%c0_38, %c0_39], %44 {strides = array<i32>} : memref<8x18xf32, #tpu.memory_space<vmem>>, vector<8x16xf32>,
    %c0_40 = arith.constant 0 : index
    %c1_41 = arith.constant 1 : index
    %46 = vector.load %arg5[%c0_40, %c1_41] : memref<8x18xf32, #tpu.memory_space<vmem>>, vector<8x16xf32>
    %47 = arith.maximumf %44, %46 : vector<8x16xf32>
    %c0_42 = arith.constant 0 : index
    %c2_43 = arith.constant 2 : index
    %48 = vector.load %arg5[%c0_42, %c2_43] : memref<8x18xf32, #tpu.memory_space<vmem>>, vector<8x16xf32>
    %49 = arith.maximumf %47, %48 : vector<8x16xf32>
    %cst_44 = arith.constant dense<0.000000e+00> : vector<8x8xf32>
    %50 = tpu.matmul %49, %7, %cst_44 {dimension_numbers = #tpu.dot_dimension_numbers<[1], [0], [0], [1], [0, 0, 1, 1], [], []>} : vector<8x16xf32>, vector<16x8xf32>, vector<8x8xf32> -> vector<8x8xf32>
    %cst_45 = arith.constant 0.000000e+00 : f32
    %51 = vector.broadcast %cst_45 : f32 to vector<8x8xf32>
    %52 = arith.maximumf %50, %51 : vector<8x8xf32>
    %c0_46 = arith.constant 0 : index
    %c1_47 = arith.constant 1 : index
    %53 = vector.load %arg4[%c0_46, %c1_47] : memref<8x10xf32, #tpu.memory_space<vmem>>, vector<8x8xf32>
    tpu.vector_store %arg4[%c0_46, %c1_47], %52 {strides = array<i32>} : memref<8x10xf32, #tpu.memory_space<vmem>>, vector<8x8xf32>,
    %c0_48 = arith.constant 0 : index
    %c0_49 = arith.constant 0 : index
    %54 = vector.load %arg4[%c0_48, %c0_49] : memref<8x10xf32, #tpu.memory_space<vmem>>, vector<8x8xf32>
    %c0_50 = arith.constant 0 : index
    %c1_51 = arith.constant 1 : index
    %55 = vector.load %arg4[%c0_50, %c1_51] : memref<8x10xf32, #tpu.memory_space<vmem>>, vector<8x8xf32>
    %c0_52 = arith.constant 0 : index
    %c2_53 = arith.constant 2 : index
    %56 = vector.load %arg4[%c0_52, %c2_53] : memref<8x10xf32, #tpu.memory_space<vmem>>, vector<8x8xf32>
    %57 = tpu.concatenate %54, %55, %56 in 0 : vector<8x8xf32>, vector<8x8xf32>, vector<8x8xf32> -> vector<24x8xf32>
    %cst_54 = arith.constant dense<0.000000e+00> : vector<8x8xf32>
    %58 = tpu.matmul %9, %57, %cst_54 {dimension_numbers = #tpu.dot_dimension_numbers<[1], [0], [0], [1], [0, 0, 1, 1], [], []>} : vector<8x24xf32>, vector<24x8xf32>, vector<8x8xf32> -> vector<8x8xf32>
    %59 = vector.extract_strided_slice %12 {offsets = [0, 0], sizes = [8, 8], strides = [1, 1]} : vector<8x16xf32> to vector<8x8xf32>
    %60 = arith.addf %58, %59 : vector<8x8xf32>
    %cst_55 = arith.constant 0.000000e+00 : f32
    %61 = vector.broadcast %cst_55 : f32 to vector<8x8xf32>
    %62 = arith.maximumf %60, %61 : vector<8x8xf32>
    %c0_56 = arith.constant 0 : index
    %c1_57 = arith.constant 1 : index
    %63 = vector.load %arg4[%c0_56, %c1_57] : memref<8x10xf32, #tpu.memory_space<vmem>>, vector<8x8xf32>
    tpu.vector_store %arg4[%c0_56, %c1_57], %62 {strides = array<i32>} : memref<8x10xf32, #tpu.memory_space<vmem>>, vector<8x8xf32>,
    %c0_58 = arith.constant 0 : index
    %c0_59 = arith.constant 0 : index
    %64 = vector.load %arg4[%c0_58, %c0_59] : memref<8x10xf32, #tpu.memory_space<vmem>>, vector<8x8xf32>
    %c0_60 = arith.constant 0 : index
    %c1_61 = arith.constant 1 : index
    %65 = vector.load %arg4[%c0_60, %c1_61] : memref<8x10xf32, #tpu.memory_space<vmem>>, vector<8x8xf32>
    %c0_62 = arith.constant 0 : index
    %c2_63 = arith.constant 2 : index
    %66 = vector.load %arg4[%c0_62, %c2_63] : memref<8x10xf32, #tpu.memory_space<vmem>>, vector<8x8xf32>
    %67 = tpu.concatenate %64, %65, %66 in 0 : vector<8x8xf32>, vector<8x8xf32>, vector<8x8xf32> -> vector<24x8xf32>
    %cst_64 = arith.constant dense<0.000000e+00> : vector<8x8xf32>
    %68 = tpu.matmul %9, %67, %cst_64 {dimension_numbers = #tpu.dot_dimension_numbers<[1], [0], [0], [1], [0, 0, 1, 1], [], []>} : vector<8x24xf32>, vector<24x8xf32>, vector<8x8xf32> -> vector<8x8xf32>
    %69 = vector.extract_strided_slice %12 {offsets = [0, 0], sizes = [8, 8], strides = [1, 1]} : vector<8x16xf32> to vector<8x8xf32>
    %70 = arith.addf %68, %69 : vector<8x8xf32>
    %71 = arith.addf %70, %50 : vector<8x8xf32>
    %cst_65 = arith.constant dense<0.000000e+00> : vector<8x4xf32>
    %72 = tpu.matmul %71, %10, %cst_65 {dimension_numbers = #tpu.dot_dimension_numbers<[1], [0], [0], [1], [0, 0, 1, 1], [], []>} : vector<8x8xf32>, vector<8x4xf32>, vector<8x4xf32> -> vector<8x4xf32>
    %73 = arith.addf %72, %13 : vector<8x4xf32>
    %c0_66 = arith.constant 0 : index
    %c0_67 = arith.constant 0 : index
    %74 = vector.load %arg2[%c0_66, %c0_67] : memref<8x4xf32, #tpu.memory_space<vmem>>, vector<8x4xf32>
    tpu.vector_store %arg2[%c0_66, %c0_67], %73 {strides = array<i32>} : memref<8x4xf32, #tpu.memory_space<vmem>>, vector<8x4xf32>,
    return
  }
}

</mosaic_0001>

<llo_original>
// kernel: tpu_custom_call.1
$region0: #{tpu_custom_call.1}
  #allocation0 [shape = 'u32[]', space=smem, size = 0x4, offset = 0x4, fixed_abs, tag = 'smem constant byte address 0x4 - core index']
  #allocation1 [shape = 'u32[144,128]{1,0:T(1,128)}', space=vmem, size = 0x12000, scoped, tag = 'internal scratch']
  #allocation2 [shape = 'f32[8,18]{1,0:T(8,128)}', space=vmem, size = 0x1000, scoped, tag = 'scratch operand']
  #allocation3 [shape = 'f32[8,10]{1,0:T(8,128)}', space=vmem, size = 0x1000, scoped, tag = 'scratch operand']
  #allocation4 [shape = 'f32[8,18]{1,0:T(8,128)}', space=vmem, size = 0x1000, scoped, tag = 'scratch operand']
  %s0 = inlined_call_operand.hbm [shape: s32[1,18], index: 0, kind: input, shape index: {}]
  %s1 = inlined_call_operand.hbm [shape: f32[16,184], index: 1, kind: input, shape index: {}]
  %s2 = inlined_call_operand.vmem [shape: f32[8,4], index: 2, kind: output, shape index: {}]
  %s3 = sld [smem:[#allocation0]]
  $region26: #{tpu_custom_call.1} parent=0
    _
  %s5 = ssub.s32 1, %s3
  %s6 = scalar_select 0, %s5, %s3
  $region1: #{tpu_custom_call.1} parent=0
    #allocation5 [shape = 'u8[512]{0}', space=vmem, size = 0x400, scoped, tag = 'input window, operand 0, single buffered']
    #allocation6 [shape = 's32[1]{0}', space=sflag, size = 0x4, scoped, tag = 'scoped memory for tpu_custom_call.1']
    #allocation7 [shape = 'u8[16384]{0}', space=vmem, size = 0x4000, scoped, tag = 'input window, operand 1, single buffered']
    #allocation8 [shape = 's32[1]{0}', space=sflag, size = 0x4, scoped, tag = 'scoped memory for tpu_custom_call.1']
    %7 = vsyncpa [#allocation6], 0
    %8 = vsyncpa [#allocation8], 0
    // Predicated region
    $region2: #{tpu_custom_call.1} parent=1 // pred_check
      _
    $region3: #{tpu_custom_call.1} parent=1 // pred_check_branch
      %10 = sbr.rel (0) target = $region5
    $region4: #{tpu_custom_call.1} parent=1 // pred_region
      %s12 = ssub.s32 16, 16
      %13 = vsyncadd [#allocation6], %s12
      %s15 = sshll.u32 [#allocation5], 4
      %s16 = int_to_ptr.vmem [resolvable:$true] %s15
      %18 = dma.hbm_to_vmem [thread:$0]  %s0, 16, %s16, [#allocation6]
    $region5: #{tpu_custom_call.1} parent=1 // pred_fallthru
      _
    // Predicated region
    $region6: #{tpu_custom_call.1} parent=1 // pred_check
      _
    $region7: #{tpu_custom_call.1} parent=1 // pred_check_branch
      %20 = sbr.rel (0) target = $region9
    $region8: #{tpu_custom_call.1} parent=1 // pred_region
      %s22 = ssub.s32 512, 512
      %23 = vsyncadd [#allocation8], %s22
      %s24 = sshll.u32 [#allocation7], 4
      %s25 = int_to_ptr.vmem [resolvable:$true] %s24
      %30 = dma.hbm_to_vmem [thread:$0]  %s1, 512, %s25, [#allocation8], 256, 256, 16
    $region9: #{tpu_custom_call.1} parent=1 // pred_fallthru
      _
    // Predicated region
    $region10: #{tpu_custom_call.1} parent=1 // pred_check
      _
    $region11: #{tpu_custom_call.1} parent=1 // pred_check_branch
      %32 = sbr.rel (0) target = $region13
    $region12: #{tpu_custom_call.1} parent=1 // pred_region
      %33 = dma.done [#allocation6], 16
    $region13: #{tpu_custom_call.1} parent=1 // pred_fallthru
      _
    // Predicated region
    $region14: #{tpu_custom_call.1} parent=1 // pred_check
      _
    $region15: #{tpu_custom_call.1} parent=1 // pred_check_branch
      %35 = sbr.rel (0) target = $region17
    $region16: #{tpu_custom_call.1} parent=1 // pred_region
      %36 = dma.done [#allocation8], 512
    $region17: #{tpu_custom_call.1} parent=1 // pred_fallthru
      _
    %vm37 = vcmask 146432
    %38 = vst.msk [vmem:[#allocation2] sm:$0xff] %vm37, 0.0
    %vm39 = vcmask 80896
    %40 = vst.msk [vmem:[#allocation3] sm:$0xff] %vm39, 0.0
    %41 = vst.msk [vmem:[#allocation4] sm:$0xff] %vm37, 0.0
    %v42 = vld [vmem:[#allocation7] sm:$0xff]
    %v43 = vld [vmem:[#allocation7 + $0x10] sm:$0xff]
    %v44 = vld [vmem:[#allocation7 + $0x8] sm:$0xff]
    %v45 = vld [vmem:[#allocation5] sm:$0x1]
    %v46 = vlaneseq
    %v47 = vshrl.u32 %v46, 7
    %v48 = vadd.s32 %v47, 8
    %v49 = vadd.s32 %v47, 16
    %v50 = vadd.s32 %v47, 24
    %v51 = vadd.s32 %v47, 32
    %v52 = vadd.s32 %v47, 40
    %v53 = vadd.s32 %v47, 48
    %v54 = vlaneseq
    %v55 = vshrl.u32 %v54, 7
    %v56 = vsub.s32 0, %v55
    %v57 = vrot.slane %v45, %v56
    %vm58 = vcmp.eq.s32.totalorder %v47, %v57
    %vm59 = vcmp.eq.s32.totalorder %v48, %v57
    %vm60 = vcmp.eq.s32.totalorder %v49, %v57
    %vm61 = vcmp.eq.s32.totalorder %v50, %v57
    %vm62 = vcmp.eq.s32.totalorder %v51, %v57
    %vm63 = vcmp.eq.s32.totalorder %v52, %v57
    %vm64 = vcmp.eq.s32.totalorder %v53, %v57
    %v65 = vsel %vm58, 1, 0
    %v66 = vsel %vm59, 1, 0
    %v67 = vsel %vm60, 1, 0
    %v68 = vsel %vm61, 1, 0
    %v69 = vsel %vm62, 1, 0
    %v70 = vsel %vm63, 1, 0
    %v71 = vsel %vm64, 1, 0
    %v72 = vcvt.s32.f32 %v65
    %v73 = vcvt.s32.f32 %v66
    %v74 = vcvt.s32.f32 %v67
    %v75 = vcvt.s32.f32 %v68
    %v76 = vcvt.s32.f32 %v69
    %v77 = vcvt.s32.f32 %v70
    %v78 = vcvt.s32.f32 %v71
    %vm79 = vcmask 408576
    %v81 = vsel %vm79, %v42, 0
    %v84 = vsel %vm79, %v43, 0
    %vm86 = vcmask 1041408
    %v88 = vsel %vm86, %v78, 0
    %90 = vmatprep.subr.mxu0 0.0
    %91 = vmatpush1.msra.mxu0 %v72
    %92 = vmatprep.subr.mxu0 0.0
    %93 = vmatpush1.msra.mxu0 %v73
    %94 = vmatprep.subr.mxu0 0.0
    %95 = vmatpush1.msra.mxu0 %v74
    %96 = vmatprep.subr.mxu0 0.0
    %97 = vmatpush1.msra.mxu0 %v75
    %98 = vmatprep.subr.mxu0 0.0
    %99 = vmatpush1.msra.mxu0 %v76
    %100 = vmatprep.subr.mxu0 0.0
    %101 = vmatpush1.msra.mxu0 %v77
    %102 = vmatprep.subr.mxu0 0.0
    %103 = vmatpush1.msra.mxu0 %v88
    %104 = vmatprep.subr.mxu0 0.0
    %105 = vmatpush1.msra.mxu0 0.0
    %106 = vmatprep.subr.mxu0 0.0
    %107 = vmatpush1.msra.mxu0 0.0
    %108 = vmatprep.subr.mxu0 0.0
    %109 = vmatpush1.msra.mxu0 0.0
    %110 = vmatprep.subr.mxu0 0.0
    %111 = vmatpush1.msra.mxu0 0.0
    %112 = vmatprep.subr.mxu0 0.0
    %113 = vmatpush1.msra.mxu0 0.0
    %114 = vmatprep.subr.mxu0 0.0
    %115 = vmatpush1.msra.mxu0 0.0
    %116 = vmatprep.subr.mxu0 0.0
    %117 = vmatpush1.msra.mxu0 0.0
    %118 = vmatprep.subr.mxu0 0.0
    %119 = vmatpush1.msra.mxu0 0.0
    %120 = vmatprep.subr.mxu0 0.0
    %121 = vmatpush1.msra.mxu0 0.0
    %122 = vmatprep.subr.mxu0 0.0
    %123 = vmatpush1.msra.mxu0 0.0
    %124 = vmatprep.subr.mxu0 0.0
    %125 = vmatpush1.msra.mxu0 0.0
    %126 = vmatprep.subr.mxu0 0.0
    %127 = vmatpush1.msra.mxu0 0.0
    %128 = vmatprep.subr.mxu0 0.0
    %129 = vmatpush1.msra.mxu0 0.0
    %130 = vmatprep.subr.mxu0 0.0
    %131 = vmatpush1.msra.mxu0 0.0
    %132 = vmatprep.subr.mxu0 0.0
    %133 = vmatpush1.msra.mxu0 0.0
    %134 = vmatprep.subr.mxu0 0.0
    %135 = vmatpush1.msra.mxu0 0.0
    %136 = vmatprep.subr.mxu0 0.0
    %137 = vmatpush1.msra.mxu0 0.0
    %138 = vmatprep.subr.mxu0 0.0
    %139 = vmatpush1.msra.mxu0 0.0
    %140 = vmatprep.subr.mxu0 0.0
    %141 = vmatpush1.msra.mxu0 0.0
    %142 = vmatprep.subr.mxu0 0.0
    %143 = vmatpush1.msra.mxu0 0.0
    %144 = vmatprep.subr.mxu0 0.0
    %145 = vmatpush1.msra.mxu0 0.0
    %146 = vmatprep.subr.mxu0 0.0
    %147 = vmatpush1.msra.mxu0 0.0
    %148 = vmatprep.subr.mxu0 0.0
    %149 = vmatpush1.msra.mxu0 0.0
    %150 = vmatprep.subr.mxu0 0.0
    %151 = vmatpush1.msra.mxu0 0.0
    %152 = vmatprep.subr.mxu0 0.0
    %153 = vmatpush1.msra.mxu0 0.0
    %154 = vmatprep.mubr.f32.mxu0 0.0
    %155 = vmatmul.mubr.f32.gmra.mrb[0].mxu0 %v81
    %v156 = vpop.f32.mrb[0].mxu0
    %v157 = vadd.f32 0.0, %v156
    %v158 = vpop.f32.mrb[0].mxu0
    %159 = vmatprep.mubr.f32.mxu0 0.0
    %160 = vmatmul.mubr.f32.gmra.mrb[0].mxu0 %v84
    %v161 = vpop.f32.mrb[0].mxu0
    %v162 = vadd.f32 0.0, %v161
    %v163 = vpop.f32.mrb[0].mxu0
    %164 = vdwg.mxu0
    %167 = vrot.lane.b32.xlu0 %v157, 127
    %v168 = vpop.permute.xlu0 %167
    %169 = vrot.lane.b32.xlu0 %v162, 127
    %v170 = vpop.permute.xlu0 %169
    %173 = vrot.lane.b32.xlu0 %v157, 126
    %v174 = vpop.permute.xlu0 %173
    %175 = vrot.lane.b32.xlu0 %v162, 126
    %v176 = vpop.permute.xlu0 %175
    %179 = vrot.lane.b32.xlu0 %v42, 64
    %v180 = vpop.permute.xlu0 %179
    %182 = vrot.lane.b32.xlu0 %v44, 112
    %v183 = vpop.permute.xlu0 %182
    %vm185 = vcmask 392192
    %v186 = vsel %vm185, %v180, 0
    %188 = vmatprep.subr.mxu0 0.0
    %189 = vmatpush1.msra.mxu0 %v157
    %190 = vmatprep.subr.mxu0 0.0
    %191 = vmatpush1.msra.mxu0 %v162
    %192 = vmatprep.subr.mxu0 0.0
    %193 = vmatpush1.msra.mxu0 %v168
    %194 = vmatprep.subr.mxu0 0.0
    %195 = vmatpush1.msra.mxu0 %v170
    %196 = vmatprep.subr.mxu0 0.0
    %197 = vmatpush1.msra.mxu0 %v174
    %198 = vmatprep.subr.mxu0 0.0
    %199 = vmatpush1.msra.mxu0 %v176
    %200 = vmatprep.subr.mxu0 0.0
    %201 = vmatpush1.msra.mxu0 0.0
    %202 = vmatprep.subr.mxu0 0.0
    %203 = vmatpush1.msra.mxu0 0.0
    %204 = vmatprep.subr.mxu0 0.0
    %205 = vmatpush1.msra.mxu0 0.0
    %206 = vmatprep.subr.mxu0 0.0
    %207 = vmatpush1.msra.mxu0 0.0
    %208 = vmatprep.subr.mxu0 0.0
    %209 = vmatpush1.msra.mxu0 0.0
    %210 = vmatprep.subr.mxu0 0.0
    %211 = vmatpush1.msra.mxu0 0.0
    %212 = vmatprep.subr.mxu0 0.0
    %213 = vmatpush1.msra.mxu0 0.0
    %214 = vmatprep.subr.mxu0 0.0
    %215 = vmatpush1.msra.mxu0 0.0
    %216 = vmatprep.subr.mxu0 0.0
    %217 = vmatpush1.msra.mxu0 0.0
    %218 = vmatprep.subr.mxu0 0.0
    %219 = vmatpush1.msra.mxu0 0.0
    %220 = vmatprep.subr.mxu0 0.0
    %221 = vmatpush1.msra.mxu0 0.0
    %222 = vmatprep.subr.mxu0 0.0
    %223 = vmatpush1.msra.mxu0 0.0
    %224 = vmatprep.subr.mxu0 0.0
    %225 = vmatpush1.msra.mxu0 0.0
    %226 = vmatprep.subr.mxu0 0.0
    %227 = vmatpush1.msra.mxu0 0.0
    %228 = vmatprep.subr.mxu0 0.0
    %229 = vmatpush1.msra.mxu0 0.0
    %230 = vmatprep.subr.mxu0 0.0
    %231 = vmatpush1.msra.mxu0 0.0
    %232 = vmatprep.subr.mxu0 0.0
    %233 = vmatpush1.msra.mxu0 0.0
    %234 = vmatprep.subr.mxu0 0.0
    %235 = vmatpush1.msra.mxu0 0.0
    %236 = vmatprep.subr.mxu0 0.0
    %237 = vmatpush1.msra.mxu0 0.0
    %238 = vmatprep.subr.mxu0 0.0
    %239 = vmatpush1.msra.mxu0 0.0
    %240 = vmatprep.subr.mxu0 0.0
    %241 = vmatpush1.msra.mxu0 0.0
    %242 = vmatprep.subr.mxu0 0.0
    %243 = vmatpush1.msra.mxu0 0.0
    %244 = vmatprep.subr.mxu0 0.0
    %245 = vmatpush1.msra.mxu0 0.0
    %246 = vmatprep.subr.mxu0 0.0
    %247 = vmatpush1.msra.mxu0 0.0
    %248 = vmatprep.subr.mxu0 0.0
    %249 = vmatpush1.msra.mxu0 0.0
    %250 = vmatprep.subr.mxu0 0.0
    %251 = vmatpush1.msra.mxu0 0.0
    %252 = vmatprep.mubr.f32.mxu0 0.0
    %253 = vmatmul.mubr.f32.gmra.mrb[0].mxu0 %v186
    %v254 = vpop.f32.mrb[0].mxu0
    %v255 = vadd.f32 %v183, %v254
    %v256 = vpop.f32.mrb[0].mxu0
    %257 = vdwg.mxu0
    %v258 = vmax.f32 %v255, 0.0
    %260 = vrot.lane.b32.xlu0 %v258, 1
    %v261 = vpop.permute.xlu0 %260
    %vm263 = vcmask 138248
    %264 = vst.msk [vmem:[#allocation2] sm:$0xff] %vm263, %v261
    %v265 = vld [vmem:[#allocation2] sm:$0xff]
    %267 = vrot.lane.b32.xlu0 %v265, 127
    %v268 = vpop.permute.xlu0 %267
    %270 = vrot.lane.b32.xlu0 %v265, 126
    %v271 = vpop.permute.xlu0 %270
    %273 = vrot.lane.b32.xlu0 %v42, 16
    %v274 = vpop.permute.xlu0 %273
    %275 = vrot.lane.b32.xlu0 %v44, 16
    %v276 = vpop.permute.xlu0 %275
    %vm277 = vcmask 130048
    %v278 = vsel %vm277, %v274, %v276
    %279 = vrot.lane.b32.xlu0 %v44, 96
    %v280 = vpop.permute.xlu0 %279
    %vm282 = vcmask 195584
    %v283 = vsel %vm282, %v278, 0
    %285 = vmatprep.subr.mxu0 0.0
    %286 = vmatpush1.msra.mxu0 %v265
    %287 = vmatprep.subr.mxu0 0.0
    %288 = vmatpush1.msra.mxu0 %v268
    %289 = vmatprep.subr.mxu0 0.0
    %290 = vmatpush1.msra.mxu0 %v271
    %291 = vmatprep.subr.mxu0 0.0
    %292 = vmatpush1.msra.mxu0 0.0
    %293 = vmatprep.subr.mxu0 0.0
    %294 = vmatpush1.msra.mxu0 0.0
    %295 = vmatprep.subr.mxu0 0.0
    %296 = vmatpush1.msra.mxu0 0.0
    %297 = vmatprep.subr.mxu0 0.0
    %298 = vmatpush1.msra.mxu0 0.0
    %299 = vmatprep.subr.mxu0 0.0
    %300 = vmatpush1.msra.mxu0 0.0
    %301 = vmatprep.subr.mxu0 0.0
    %302 = vmatpush1.msra.mxu0 0.0
    %303 = vmatprep.subr.mxu0 0.0
    %304 = vmatpush1.msra.mxu0 0.0
    %305 = vmatprep.subr.mxu0 0.0
    %306 = vmatpush1.msra.mxu0 0.0
    %307 = vmatprep.subr.mxu0 0.0
    %308 = vmatpush1.msra.mxu0 0.0
    %309 = vmatprep.subr.mxu0 0.0
    %310 = vmatpush1.msra.mxu0 0.0
    %311 = vmatprep.subr.mxu0 0.0
    %312 = vmatpush1.msra.mxu0 0.0
    %313 = vmatprep.subr.mxu0 0.0
    %314 = vmatpush1.msra.mxu0 0.0
    %315 = vmatprep.subr.mxu0 0.0
    %316 = vmatpush1.msra.mxu0 0.0
    %317 = vmatprep.subr.mxu0 0.0
    %318 = vmatpush1.msra.mxu0 0.0
    %319 = vmatprep.subr.mxu0 0.0
    %320 = vmatpush1.msra.mxu0 0.0
    %321 = vmatprep.subr.mxu0 0.0
    %322 = vmatpush1.msra.mxu0 0.0
    %323 = vmatprep.subr.mxu0 0.0
    %324 = vmatpush1.msra.mxu0 0.0
    %325 = vmatprep.subr.mxu0 0.0
    %326 = vmatpush1.msra.mxu0 0.0
    %327 = vmatprep.subr.mxu0 0.0
    %328 = vmatpush1.msra.mxu0 0.0
    %329 = vmatprep.subr.mxu0 0.0
    %330 = vmatpush1.msra.mxu0 0.0
    %331 = vmatprep.subr.mxu0 0.0
    %332 = vmatpush1.msra.mxu0 0.0
    %333 = vmatprep.subr.mxu0 0.0
    %334 = vmatpush1.msra.mxu0 0.0
    %335 = vmatprep.subr.mxu0 0.0
    %336 = vmatpush1.msra.mxu0 0.0
    %337 = vmatprep.subr.mxu0 0.0
    %338 = vmatpush1.msra.mxu0 0.0
    %339 = vmatprep.subr.mxu0 0.0
    %340 = vmatpush1.msra.mxu0 0.0
    %341 = vmatprep.subr.mxu0 0.0
    %342 = vmatpush1.msra.mxu0 0.0
    %343 = vmatprep.subr.mxu0 0.0
    %344 = vmatpush1.msra.mxu0 0.0
    %345 = vmatprep.subr.mxu0 0.0
    %346 = vmatpush1.msra.mxu0 0.0
    %347 = vmatprep.subr.mxu0 0.0
    %348 = vmatpush1.msra.mxu0 0.0
    %349 = vmatprep.mubr.f32.mxu0 0.0
    %350 = vmatmul.mubr.f32.gmra.mrb[0].mxu0 %v283
    %v351 = vpop.f32.mrb[0].mxu0
    %v352 = vadd.f32 %v280, %v351
    %v353 = vpop.f32.mrb[0].mxu0
    %354 = vdwg.mxu0
    %v355 = vmax.f32 %v352, 0.0
    %357 = vrot.lane.b32.xlu0 %v355, 1
    %v358 = vpop.permute.xlu0 %357
    %360 = vst.msk [vmem:[#allocation2] sm:$0xff] %vm263, %v358
    %v361 = vld [vmem:[#allocation2] sm:$0xff]
    %363 = vrot.lane.b32.xlu0 %v361, 127
    %v364 = vpop.permute.xlu0 %363
    %366 = vrot.lane.b32.xlu0 %v361, 126
    %v367 = vpop.permute.xlu0 %366
    %369 = vmatprep.subr.mxu0 0.0
    %370 = vmatpush1.msra.mxu0 %v361
    %371 = vmatprep.subr.mxu0 0.0
    %372 = vmatpush1.msra.mxu0 %v364
    %373 = vmatprep.subr.mxu0 0.0
    %374 = vmatpush1.msra.mxu0 %v367
    %375 = vmatprep.subr.mxu0 0.0
    %376 = vmatpush1.msra.mxu0 0.0
    %377 = vmatprep.subr.mxu0 0.0
    %378 = vmatpush1.msra.mxu0 0.0
    %379 = vmatprep.subr.mxu0 0.0
    %380 = vmatpush1.msra.mxu0 0.0
    %381 = vmatprep.subr.mxu0 0.0
    %382 = vmatpush1.msra.mxu0 0.0
    %383 = vmatprep.subr.mxu0 0.0
    %384 = vmatpush1.msra.mxu0 0.0
    %385 = vmatprep.subr.mxu0 0.0
    %386 = vmatpush1.msra.mxu0 0.0
    %387 = vmatprep.subr.mxu0 0.0
    %388 = vmatpush1.msra.mxu0 0.0
    %389 = vmatprep.subr.mxu0 0.0
    %390 = vmatpush1.msra.mxu0 0.0
    %391 = vmatprep.subr.mxu0 0.0
    %392 = vmatpush1.msra.mxu0 0.0
    %393 = vmatprep.subr.mxu0 0.0
    %394 = vmatpush1.msra.mxu0 0.0
    %395 = vmatprep.subr.mxu0 0.0
    %396 = vmatpush1.msra.mxu0 0.0
    %397 = vmatprep.subr.mxu0 0.0
    %398 = vmatpush1.msra.mxu0 0.0
    %399 = vmatprep.subr.mxu0 0.0
    %400 = vmatpush1.msra.mxu0 0.0
    %401 = vmatprep.subr.mxu0 0.0
    %402 = vmatpush1.msra.mxu0 0.0
    %403 = vmatprep.subr.mxu0 0.0
    %404 = vmatpush1.msra.mxu0 0.0
    %405 = vmatprep.subr.mxu0 0.0
    %406 = vmatpush1.msra.mxu0 0.0
    %407 = vmatprep.subr.mxu0 0.0
    %408 = vmatpush1.msra.mxu0 0.0
    %409 = vmatprep.subr.mxu0 0.0
    %410 = vmatpush1.msra.mxu0 0.0
    %411 = vmatprep.subr.mxu0 0.0
    %412 = vmatpush1.msra.mxu0 0.0
    %413 = vmatprep.subr.mxu0 0.0
    %414 = vmatpush1.msra.mxu0 0.0
    %415 = vmatprep.subr.mxu0 0.0
    %416 = vmatpush1.msra.mxu0 0.0
    %417 = vmatprep.subr.mxu0 0.0
    %418 = vmatpush1.msra.mxu0 0.0
    %419 = vmatprep.subr.mxu0 0.0
    %420 = vmatpush1.msra.mxu0 0.0
    %421 = vmatprep.subr.mxu0 0.0
    %422 = vmatpush1.msra.mxu0 0.0
    %423 = vmatprep.subr.mxu0 0.0
    %424 = vmatpush1.msra.mxu0 0.0
    %425 = vmatprep.subr.mxu0 0.0
    %426 = vmatpush1.msra.mxu0 0.0
    %427 = vmatprep.subr.mxu0 0.0
    %428 = vmatpush1.msra.mxu0 0.0
    %429 = vmatprep.subr.mxu0 0.0
    %430 = vmatpush1.msra.mxu0 0.0
    %431 = vmatprep.subr.mxu0 0.0
    %432 = vmatpush1.msra.mxu0 0.0
    %433 = vmatprep.mubr.f32.mxu0 0.0
    %434 = vmatmul.mubr.f32.gmra.mrb[0].mxu0 %v283
    %v435 = vpop.f32.mrb[0].mxu0
    %v436 = vadd.f32 %v280, %v435
    %v437 = vpop.f32.mrb[0].mxu0
    %438 = vdwg.mxu0
    %439 = vst.msk [vmem:[#allocation4] sm:$0xff] %vm277, %v436
    %v440 = vld [vmem:[#allocation4] sm:$0xff]
    %442 = vrot.lane.b32.xlu0 %v440, 127
    %v443 = vpop.permute.xlu0 %442
    %v445 = vmax.f32 %v436, %v443
    %446 = vrot.lane.b32.xlu0 %v440, 126
    %v447 = vpop.permute.xlu0 %446
    %v449 = vmax.f32 %v445, %v447
    %450 = vrot.lane.b32.xlu0 %v42, 72
    %v451 = vpop.permute.xlu0 %450
    %452 = vrot.lane.b32.xlu0 %v43, 72
    %v453 = vpop.permute.xlu0 %452
    %v457 = vsel %vm277, %v449, 0
    %459 = vmatprep.subr.mxu0 0.0
    %460 = vmatpush1.msra.mxu0 %v451
    %461 = vmatprep.subr.mxu0 0.0
    %462 = vmatpush1.msra.mxu0 %v453
    %463 = vmatprep.subr.mxu0 0.0
    %464 = vmatpush1.msra.mxu0 0.0
    %465 = vmatprep.subr.mxu0 0.0
    %466 = vmatpush1.msra.mxu0 0.0
    %467 = vmatprep.subr.mxu0 0.0
    %468 = vmatpush1.msra.mxu0 0.0
    %469 = vmatprep.subr.mxu0 0.0
    %470 = vmatpush1.msra.mxu0 0.0
    %471 = vmatprep.subr.mxu0 0.0
    %472 = vmatpush1.msra.mxu0 0.0
    %473 = vmatprep.subr.mxu0 0.0
    %474 = vmatpush1.msra.mxu0 0.0
    %475 = vmatprep.subr.mxu0 0.0
    %476 = vmatpush1.msra.mxu0 0.0
    %477 = vmatprep.subr.mxu0 0.0
    %478 = vmatpush1.msra.mxu0 0.0
    %479 = vmatprep.subr.mxu0 0.0
    %480 = vmatpush1.msra.mxu0 0.0
    %481 = vmatprep.subr.mxu0 0.0
    %482 = vmatpush1.msra.mxu0 0.0
    %483 = vmatprep.subr.mxu0 0.0
    %484 = vmatpush1.msra.mxu0 0.0
    %485 = vmatprep.subr.mxu0 0.0
    %486 = vmatpush1.msra.mxu0 0.0
    %487 = vmatprep.subr.mxu0 0.0
    %488 = vmatpush1.msra.mxu0 0.0
    %489 = vmatprep.subr.mxu0 0.0
    %490 = vmatpush1.msra.mxu0 0.0
    %491 = vmatprep.subr.mxu0 0.0
    %492 = vmatpush1.msra.mxu0 0.0
    %493 = vmatprep.subr.mxu0 0.0
    %494 = vmatpush1.msra.mxu0 0.0
    %495 = vmatprep.subr.mxu0 0.0
    %496 = vmatpush1.msra.mxu0 0.0
    %497 = vmatprep.subr.mxu0 0.0
    %498 = vmatpush1.msra.mxu0 0.0
    %499 = vmatprep.subr.mxu0 0.0
    %500 = vmatpush1.msra.mxu0 0.0
    %501 = vmatprep.subr.mxu0 0.0
    %502 = vmatpush1.msra.mxu0 0.0
    %503 = vmatprep.subr.mxu0 0.0
    %504 = vmatpush1.msra.mxu0 0.0
    %505 = vmatprep.subr.mxu0 0.0
    %506 = vmatpush1.msra.mxu0 0.0
    %507 = vmatprep.subr.mxu0 0.0
    %508 = vmatpush1.msra.mxu0 0.0
    %509 = vmatprep.subr.mxu0 0.0
    %510 = vmatpush1.msra.mxu0 0.0
    %511 = vmatprep.subr.mxu0 0.0
    %512 = vmatpush1.msra.mxu0 0.0
    %513 = vmatprep.subr.mxu0 0.0
    %514 = vmatpush1.msra.mxu0 0.0
    %515 = vmatprep.subr.mxu0 0.0
    %516 = vmatpush1.msra.mxu0 0.0
    %517 = vmatprep.subr.mxu0 0.0
    %518 = vmatpush1.msra.mxu0 0.0
    %519 = vmatprep.subr.mxu0 0.0
    %520 = vmatpush1.msra.mxu0 0.0
    %521 = vmatprep.subr.mxu0 0.0
    %522 = vmatpush1.msra.mxu0 0.0
    %523 = vmatprep.mubr.f32.mxu0 0.0
    %524 = vmatmul.mubr.f32.gmra.mrb[0].mxu0 %v457
    %v525 = vpop.f32.mrb[0].mxu0
    %v526 = vadd.f32 0.0, %v525
    %v527 = vpop.f32.mrb[0].mxu0
    %528 = vdwg.mxu0
    %v529 = vmax.f32 %v526, 0.0
    %531 = vrot.lane.b32.xlu0 %v529, 1
    %v532 = vpop.permute.xlu0 %531
    %vm534 = vcmask 72712
    %535 = vst.msk [vmem:[#allocation3] sm:$0xff] %vm534, %v532
    %v536 = vld [vmem:[#allocation3] sm:$0xff]
    %538 = vrot.lane.b32.xlu0 %v536, 127
    %v539 = vpop.permute.xlu0 %538
    %541 = vrot.lane.b32.xlu0 %v536, 126
    %v542 = vpop.permute.xlu0 %541
    %544 = vmatprep.subr.mxu0 0.0
    %545 = vmatpush1.msra.mxu0 %v536
    %546 = vmatprep.subr.mxu0 0.0
    %547 = vmatpush1.msra.mxu0 %v539
    %548 = vmatprep.subr.mxu0 0.0
    %549 = vmatpush1.msra.mxu0 %v542
    %550 = vmatprep.subr.mxu0 0.0
    %551 = vmatpush1.msra.mxu0 0.0
    %552 = vmatprep.subr.mxu0 0.0
    %553 = vmatpush1.msra.mxu0 0.0
    %554 = vmatprep.subr.mxu0 0.0
    %555 = vmatpush1.msra.mxu0 0.0
    %556 = vmatprep.subr.mxu0 0.0
    %557 = vmatpush1.msra.mxu0 0.0
    %558 = vmatprep.subr.mxu0 0.0
    %559 = vmatpush1.msra.mxu0 0.0
    %560 = vmatprep.subr.mxu0 0.0
    %561 = vmatpush1.msra.mxu0 0.0
    %562 = vmatprep.subr.mxu0 0.0
    %563 = vmatpush1.msra.mxu0 0.0
    %564 = vmatprep.subr.mxu0 0.0
    %565 = vmatpush1.msra.mxu0 0.0
    %566 = vmatprep.subr.mxu0 0.0
    %567 = vmatpush1.msra.mxu0 0.0
    %568 = vmatprep.subr.mxu0 0.0
    %569 = vmatpush1.msra.mxu0 0.0
    %570 = vmatprep.subr.mxu0 0.0
    %571 = vmatpush1.msra.mxu0 0.0
    %572 = vmatprep.subr.mxu0 0.0
    %573 = vmatpush1.msra.mxu0 0.0
    %574 = vmatprep.subr.mxu0 0.0
    %575 = vmatpush1.msra.mxu0 0.0
    %576 = vmatprep.subr.mxu0 0.0
    %577 = vmatpush1.msra.mxu0 0.0
    %578 = vmatprep.subr.mxu0 0.0
    %579 = vmatpush1.msra.mxu0 0.0
    %580 = vmatprep.subr.mxu0 0.0
    %581 = vmatpush1.msra.mxu0 0.0
    %582 = vmatprep.subr.mxu0 0.0
    %583 = vmatpush1.msra.mxu0 0.0
    %584 = vmatprep.subr.mxu0 0.0
    %585 = vmatpush1.msra.mxu0 0.0
    %586 = vmatprep.subr.mxu0 0.0
    %587 = vmatpush1.msra.mxu0 0.0
    %588 = vmatprep.subr.mxu0 0.0
    %589 = vmatpush1.msra.mxu0 0.0
    %590 = vmatprep.subr.mxu0 0.0
    %591 = vmatpush1.msra.mxu0 0.0
    %592 = vmatprep.subr.mxu0 0.0
    %593 = vmatpush1.msra.mxu0 0.0
    %594 = vmatprep.subr.mxu0 0.0
    %595 = vmatpush1.msra.mxu0 0.0
    %596 = vmatprep.subr.mxu0 0.0
    %597 = vmatpush1.msra.mxu0 0.0
    %598 = vmatprep.subr.mxu0 0.0
    %599 = vmatpush1.msra.mxu0 0.0
    %600 = vmatprep.subr.mxu0 0.0
    %601 = vmatpush1.msra.mxu0 0.0
    %602 = vmatprep.subr.mxu0 0.0
    %603 = vmatpush1.msra.mxu0 0.0
    %604 = vmatprep.subr.mxu0 0.0
    %605 = vmatpush1.msra.mxu0 0.0
    %606 = vmatprep.subr.mxu0 0.0
    %607 = vmatpush1.msra.mxu0 0.0
    %608 = vmatprep.mubr.f32.mxu0 0.0
    %609 = vmatmul.mubr.f32.gmra.mrb[0].mxu0 %v283
    %v610 = vpop.f32.mrb[0].mxu0
    %v611 = vadd.f32 %v280, %v610
    %v612 = vpop.f32.mrb[0].mxu0
    %613 = vdwg.mxu0
    %v614 = vmax.f32 %v611, 0.0
    %616 = vrot.lane.b32.xlu0 %v614, 1
    %v617 = vpop.permute.xlu0 %616
    %619 = vst.msk [vmem:[#allocation3] sm:$0xff] %vm534, %v617
    %v620 = vld [vmem:[#allocation3] sm:$0xff]
    %622 = vrot.lane.b32.xlu0 %v620, 127
    %v623 = vpop.permute.xlu0 %622
    %625 = vrot.lane.b32.xlu0 %v620, 126
    %v626 = vpop.permute.xlu0 %625
    %628 = vmatprep.subr.mxu0 0.0
    %629 = vmatpush1.msra.mxu0 %v620
    %630 = vmatprep.subr.mxu0 0.0
    %631 = vmatpush1.msra.mxu0 %v623
    %632 = vmatprep.subr.mxu0 0.0
    %633 = vmatpush1.msra.mxu0 %v626
    %634 = vmatprep.subr.mxu0 0.0
    %635 = vmatpush1.msra.mxu0 0.0
    %636 = vmatprep.subr.mxu0 0.0
    %637 = vmatpush1.msra.mxu0 0.0
    %638 = vmatprep.subr.mxu0 0.0
    %639 = vmatpush1.msra.mxu0 0.0
    %640 = vmatprep.subr.mxu0 0.0
    %641 = vmatpush1.msra.mxu0 0.0
    %642 = vmatprep.subr.mxu0 0.0
    %643 = vmatpush1.msra.mxu0 0.0
    %644 = vmatprep.subr.mxu0 0.0
    %645 = vmatpush1.msra.mxu0 0.0
    %646 = vmatprep.subr.mxu0 0.0
    %647 = vmatpush1.msra.mxu0 0.0
    %648 = vmatprep.subr.mxu0 0.0
    %649 = vmatpush1.msra.mxu0 0.0
    %650 = vmatprep.subr.mxu0 0.0
    %651 = vmatpush1.msra.mxu0 0.0
    %652 = vmatprep.subr.mxu0 0.0
    %653 = vmatpush1.msra.mxu0 0.0
    %654 = vmatprep.subr.mxu0 0.0
    %655 = vmatpush1.msra.mxu0 0.0
    %656 = vmatprep.subr.mxu0 0.0
    %657 = vmatpush1.msra.mxu0 0.0
    %658 = vmatprep.subr.mxu0 0.0
    %659 = vmatpush1.msra.mxu0 0.0
    %660 = vmatprep.subr.mxu0 0.0
    %661 = vmatpush1.msra.mxu0 0.0
    %662 = vmatprep.subr.mxu0 0.0
    %663 = vmatpush1.msra.mxu0 0.0
    %664 = vmatprep.subr.mxu0 0.0
    %665 = vmatpush1.msra.mxu0 0.0
    %666 = vmatprep.subr.mxu0 0.0
    %667 = vmatpush1.msra.mxu0 0.0
    %668 = vmatprep.subr.mxu0 0.0
    %669 = vmatpush1.msra.mxu0 0.0
    %670 = vmatprep.subr.mxu0 0.0
    %671 = vmatpush1.msra.mxu0 0.0
    %672 = vmatprep.subr.mxu0 0.0
    %673 = vmatpush1.msra.mxu0 0.0
    %674 = vmatprep.subr.mxu0 0.0
    %675 = vmatpush1.msra.mxu0 0.0
    %676 = vmatprep.subr.mxu0 0.0
    %677 = vmatpush1.msra.mxu0 0.0
    %678 = vmatprep.subr.mxu0 0.0
    %679 = vmatpush1.msra.mxu0 0.0
    %680 = vmatprep.subr.mxu0 0.0
    %681 = vmatpush1.msra.mxu0 0.0
    %682 = vmatprep.subr.mxu0 0.0
    %683 = vmatpush1.msra.mxu0 0.0
    %684 = vmatprep.subr.mxu0 0.0
    %685 = vmatpush1.msra.mxu0 0.0
    %686 = vmatprep.subr.mxu0 0.0
    %687 = vmatpush1.msra.mxu0 0.0
    %688 = vmatprep.subr.mxu0 0.0
    %689 = vmatpush1.msra.mxu0 0.0
    %690 = vmatprep.subr.mxu0 0.0
    %691 = vmatpush1.msra.mxu0 0.0
    %692 = vmatprep.mubr.f32.mxu0 0.0
    %693 = vmatmul.mubr.f32.gmra.mrb[0].mxu0 %v283
    %v694 = vpop.f32.mrb[0].mxu0
    %v695 = vadd.f32 %v280, %v694
    %v696 = vpop.f32.mrb[0].mxu0
    %697 = vdwg.mxu0
    %v698 = vadd.f32 %v695, %v526
    %699 = vrot.lane.b32.xlu0 %v44, 120
    %v700 = vpop.permute.xlu0 %699
    %702 = vrot.lane.b32.xlu0 %v44, 80
    %v703 = vpop.permute.xlu0 %702
    %vm705 = vcmask 64512
    %v707 = vsel %vm705, %v698, 0
    %709 = vmatprep.subr.mxu0 0.0
    %710 = vmatpush1.msra.mxu0 %v700
    %711 = vmatprep.subr.mxu0 0.0
    %712 = vmatpush1.msra.mxu0 0.0
    %713 = vmatprep.subr.mxu0 0.0
    %714 = vmatpush1.msra.mxu0 0.0
    %715 = vmatprep.subr.mxu0 0.0
    %716 = vmatpush1.msra.mxu0 0.0
    %717 = vmatprep.subr.mxu0 0.0
    %718 = vmatpush1.msra.mxu0 0.0
    %719 = vmatprep.subr.mxu0 0.0
    %720 = vmatpush1.msra.mxu0 0.0
    %721 = vmatprep.subr.mxu0 0.0
    %722 = vmatpush1.msra.mxu0 0.0
    %723 = vmatprep.subr.mxu0 0.0
    %724 = vmatpush1.msra.mxu0 0.0
    %725 = vmatprep.subr.mxu0 0.0
    %726 = vmatpush1.msra.mxu0 0.0
    %727 = vmatprep.subr.mxu0 0.0
    %728 = vmatpush1.msra.mxu0 0.0
    %729 = vmatprep.subr.mxu0 0.0
    %730 = vmatpush1.msra.mxu0 0.0
    %731 = vmatprep.subr.mxu0 0.0
    %732 = vmatpush1.msra.mxu0 0.0
    %733 = vmatprep.subr.mxu0 0.0
    %734 = vmatpush1.msra.mxu0 0.0
    %735 = vmatprep.subr.mxu0 0.0
    %736 = vmatpush1.msra.mxu0 0.0
    %737 = vmatprep.subr.mxu0 0.0
    %738 = vmatpush1.msra.mxu0 0.0
    %739 = vmatprep.subr.mxu0 0.0
    %740 = vmatpush1.msra.mxu0 0.0
    %741 = vmatprep.subr.mxu0 0.0
    %742 = vmatpush1.msra.mxu0 0.0
    %743 = vmatprep.subr.mxu0 0.0
    %744 = vmatpush1.msra.mxu0 0.0
    %745 = vmatprep.subr.mxu0 0.0
    %746 = vmatpush1.msra.mxu0 0.0
    %747 = vmatprep.subr.mxu0 0.0
    %748 = vmatpush1.msra.mxu0 0.0
    %749 = vmatprep.subr.mxu0 0.0
    %750 = vmatpush1.msra.mxu0 0.0
    %751 = vmatprep.subr.mxu0 0.0
    %752 = vmatpush1.msra.mxu0 0.0
    %753 = vmatprep.subr.mxu0 0.0
    %754 = vmatpush1.msra.mxu0 0.0
    %755 = vmatprep.subr.mxu0 0.0
    %756 = vmatpush1.msra.mxu0 0.0
    %757 = vmatprep.subr.mxu0 0.0
    %758 = vmatpush1.msra.mxu0 0.0
    %759 = vmatprep.subr.mxu0 0.0
    %760 = vmatpush1.msra.mxu0 0.0
    %761 = vmatprep.subr.mxu0 0.0
    %762 = vmatpush1.msra.mxu0 0.0
    %763 = vmatprep.subr.mxu0 0.0
    %764 = vmatpush1.msra.mxu0 0.0
    %765 = vmatprep.subr.mxu0 0.0
    %766 = vmatpush1.msra.mxu0 0.0
    %767 = vmatprep.subr.mxu0 0.0
    %768 = vmatpush1.msra.mxu0 0.0
    %769 = vmatprep.subr.mxu0 0.0
    %770 = vmatpush1.msra.mxu0 0.0
    %771 = vmatprep.subr.mxu0 0.0
    %772 = vmatpush1.msra.mxu0 0.0
    %773 = vmatprep.mubr.f32.mxu0 0.0
    %774 = vmatmul.mubr.f32.gmra.mrb[0].mxu0 %v707
    %v775 = vpop.f32.mrb[0].mxu0
    %v776 = vadd.f32 %v703, %v775
    %v777 = vpop.f32.mrb[0].mxu0
    %778 = vdwg.mxu0
    %vm779 = vcmask 31744
    %780 = vst.msk [vmem:[%s2] sm:$0xff] %vm779, %v776
    // Predicated region
    $region18: #{tpu_custom_call.1} parent=1 // pred_check
      _
    $region19: #{tpu_custom_call.1} parent=1 // pred_check_branch
      %782 = sbr.rel (0) target = $region21
    $region20: #{tpu_custom_call.1} parent=1 // pred_region
      _
    $region21: #{tpu_custom_call.1} parent=1 // pred_fallthru
      _
    // Predicated region
    $region22: #{tpu_custom_call.1} parent=1 // pred_check
      _
    $region23: #{tpu_custom_call.1} parent=1 // pred_check_branch
      %784 = sbr.rel (0) target = $region25
    $region24: #{tpu_custom_call.1} parent=1 // pred_region
      _
    $region25: #{tpu_custom_call.1} parent=1 // pred_fallthru
      _
    %785 = vsyncpa [#allocation6], 1
    %786 = vsyncpa [#allocation8], 1

</llo_original>
